<compile_context>
chip_gen: v7x
topology: tpu7x:2x2x1
jax: 0.10.0
libtpu: 0.0.40
codegen_flags: <defaults>
</compile_context>

<pallas_src>
import jax
import jax.numpy as jnp
from jax.experimental import pallas as pl
from jax.experimental.pallas import tpu as pltpu

LANE = 128


def _round_up(n, m):
    return ((n + m - 1) // m) * m


def _pad2d(a, rows, cols):
    return jnp.pad(a, ((0, rows - a.shape[0]), (0, cols - a.shape[1])))


# ----------------------------------------------------------------------------
# Kernel: one batch tile (tm rows) per grid step; weights VMEM-resident.
# ----------------------------------------------------------------------------
def goal_actor_kernel(
    x_ref, goal_ref,                    # raw f32 activations (unpadded lanes)
    w_enc_ref, b_enc_ref,               # synthetic obs_net encoder (bf16 / f32 bias)
    w_om_ref, b_om_ref,                 # obs_munet
    w_gm_ref, b_gm_ref,                 # goal_munet
    wf_ref, b_f_ref,                    # fused final_layer weight [obss ; goals] rows
    logits_ref,                         # f32 (tm, 128) lane-dense output slab
):
    f32 = jnp.float32
    bf16 = jnp.bfloat16

    # --- obs_net (synthetic Linear + ReLU encoder): bf16 MXU, f32 accumulate ---
    x = x_ref[...].astype(bf16)
    obs_out = jnp.dot(x, w_enc_ref[...], preferred_element_type=f32)
    obs_out = jnp.maximum(obs_out + b_enc_ref[...], 0.0)          # f32 elementwise

    # --- obs_munet: Linear -> ReLU (output lanes padded to 128, exact zeros) ---
    obss = jnp.dot(obs_out.astype(bf16), w_om_ref[...], preferred_element_type=f32)
    obss = jnp.maximum(obss + b_om_ref[...], 0.0)

    # --- goal_munet: Linear -> ReLU ---
    g = goal_ref[...].astype(bf16)
    goals = jnp.dot(g, w_gm_ref[...], preferred_element_type=f32)
    goals = jnp.maximum(goals + b_gm_ref[...], 0.0)

    # --- final_layer: concat at a 128-lane boundary (vreg-granular) then a
    #     single K=256 matmul.  State term is dropped here (zeros -> contributes
    #     exactly 0); the wrapper adds it back for non-zero callers.
    cat = jnp.concatenate([obss, goals], axis=1).astype(bf16)     # (tm, 256)
    logits = jnp.dot(cat, wf_ref[...], preferred_element_type=f32) + b_f_ref[...]
    logits_ref[...] = logits.astype(logits_ref.dtype)


# ----------------------------------------------------------------------------
# Parameter packing (done once): zero-pad to lane-friendly dims, cast to bf16.
# ----------------------------------------------------------------------------
def prepare_params(p, n_actions, state_dim):
    obs_in, o_dim = p["w_enc"].shape
    goal_in = p["w_gm"].shape[0]                 # == o_dim
    hidden = p["w_om"].shape[1]

    o_dim_p = _round_up(o_dim, LANE)             # 96  -> 128
    hidden_p = _round_up(hidden, LANE)           # 32  -> 128 (vreg-aligned halves)
    n_act_p = _round_up(n_actions, LANE)         # 32  -> 128

    bf16, f32 = jnp.bfloat16, jnp.float32

    # Fused final-layer weight rows: [obss block (hidden_p) ; goals block (hidden_p)].
    # Padded rows are zero, so padded obss/goals lanes contribute exactly 0.
    wf_og = jnp.concatenate(
        [_pad2d(p["wf_o"], hidden_p, n_act_p),
         _pad2d(p["wf_g"], hidden_p, n_act_p)], axis=0).astype(bf16)

    return dict(
        w_enc=_pad2d(p["w_enc"], obs_in, o_dim_p).astype(bf16),   # K stays raw (64)
        b_enc=_pad2d(p["b_enc"], 1, o_dim_p).astype(f32),
        w_om=_pad2d(p["w_om"], o_dim_p, hidden_p).astype(bf16),
        b_om=_pad2d(p["b_om"], 1, hidden_p).astype(f32),
        w_gm=_pad2d(p["w_gm"], goal_in, hidden_p).astype(bf16),   # K stays raw (96)
        b_gm=_pad2d(p["b_gm"], 1, hidden_p).astype(f32),
        wf=wf_og,
        b_f=_pad2d(p["b_f"], 1, n_act_p).astype(f32),
        wf_s=p["wf_s"],                                           # f32, state path
        dims=dict(obs_in=obs_in, o_dim=o_dim, goal_in=goal_in, hidden=hidden,
                  o_dim_p=o_dim_p, hidden_p=hidden_p,
                  n_actions=n_actions, n_act_p=n_act_p, state_dim=state_dim),
    )


def _pick_tile(batch, tm_max=512):
    """Batch tile: big (fewer grid steps), 16-sublane aligned for B>=16, and
    kept so the grid has >= 2 steps when the batch allows (v7x megacore)."""
    align = 16 if batch >= 16 else 8
    tm = min(tm_max, _round_up(batch, align))
    if pl.cdiv(batch, tm) < 2 and batch > 2 * align:
        tm = _round_up(pl.cdiv(batch, 2), align)
    return tm


# ----------------------------------------------------------------------------
# Wrapper: batch-tiled pallas_call, raw f32 activations, VMEM-resident weights.
# ----------------------------------------------------------------------------
def goal_nethack_actor(x, latent_goal, prep, state=None, tm_max=512):
    d = prep["dims"]
    B = x.shape[0]
    tm = _pick_tile(B, tm_max)

    operands = (
        x, latent_goal,
        prep["w_enc"], prep["b_enc"],
        prep["w_om"], prep["b_om"],
        prep["w_gm"], prep["b_gm"],
        prep["wf"], prep["b_f"],
    )

    def row_spec(cols):                    # activation tile: marches over batch
        return pl.BlockSpec((tm, cols), lambda i: (i, 0))

    def const_spec(a):                     # weight/bias: constant block -> resident
        return pl.BlockSpec(a.shape, lambda i: (0, 0))

    in_specs = [row_spec(d["obs_in"]), row_spec(d["goal_in"])] + \
               [const_spec(a) for a in operands[2:]]

    logits_pad = pl.pallas_call(
        goal_actor_kernel,
        out_shape=jax.ShapeDtypeStruct((B, d["n_act_p"]), jnp.float32),
        grid=(pl.cdiv(B, tm),),
        in_specs=in_specs,
        out_specs=pl.BlockSpec((tm, d["n_act_p"]), lambda i: (i, 0)),
        compiler_params=pltpu.CompilerParams(
            dimension_semantics=("parallel",),          # shard batch on v7x's 2 TCs
            vmem_limit_bytes=16 * 1024 * 1024),
    )(*operands)

    logits = logits_pad[:, :d["n_actions"]]

    if state is None:
        state = jnp.zeros((B, d["state_dim"]), jnp.float32)
    else:
        # Kernel drops the state term (common case: zeros -> exact 0).  Restore
        # full semantics for non-zero callers with a tiny out-of-kernel matmul.
        logits = logits + jnp.dot(state.astype(jnp.bfloat16),
                                  prep["wf_s"].astype(jnp.bfloat16),
                                  preferred_element_type=jnp.float32)
    return logits, state


# ----------------------------------------------------------------------------
# Init + reference
# ----------------------------------------------------------------------------
def init_params(key, obs_in_dim, o_dim, state_dim, n_actions):
    """PyTorch-style uniform(+-1/sqrt(fan_in)) init; weights stored (in, out)."""
    hidden = o_dim // 3
    ks = jax.random.split(key, 8)

    def linear(kw, kb, fan_in, fan_out):
        bound = 1.0 / (fan_in ** 0.5)
        w = jax.random.uniform(kw, (fan_in, fan_out), jnp.float32, -bound, bound)
        b = jax.random.uniform(kb, (1, fan_out), jnp.float32, -bound, bound)
        return w, b

    w_enc, b_enc = linear(ks[0], ks[1], obs_in_dim, o_dim)    # synthetic obs_net
    w_om, b_om = linear(ks[2], ks[3], o_dim, hidden)          # obs_munet
    w_gm, b_gm = linear(ks[4], ks[5], o_dim, hidden)          # goal_munet
    wf, b_f = linear(ks[6], ks[7], hidden + hidden + state_dim, n_actions)

    return dict(
        w_enc=w_enc, b_enc=b_enc,
        w_om=w_om, b_om=b_om,
        w_gm=w_gm, b_gm=b_gm,
        wf_o=wf[:hidden], wf_g=wf[hidden:2 * hidden], wf_s=wf[2 * hidden:],
        b_f=b_f,
    )


def reference_forward(x, latent_goal, state, p):
    """Pure-JAX reference mirroring the module; bf16 matmul inputs, f32
    accumulate (same numerics contract as the kernel).  Includes the state term."""
    bf16, f32 = jnp.bfloat16, jnp.float32

    def lin(a, w, b):
        return jnp.dot(a.astype(bf16), w.astype(bf16),
                       preferred_element_type=f32) + b

    obs_out = jnp.maximum(lin(x, p["w_enc"], p["b_enc"]), 0.0)
    obss = jnp.maximum(lin(obs_out, p["w_om"], p["b_om"]), 0.0)
    goals = jnp.maximum(lin(latent_goal, p["w_gm"], p["b_gm"]), 0.0)
    cat = jnp.concatenate([obss, goals, state], axis=1)
    w_full = jnp.concatenate([p["wf_o"], p["wf_g"], p["wf_s"]], axis=0)
    return lin(cat, w_full, p["b_f"])


if __name__ == "__main__":
    # Small shapes consistent with the module (o_dim divisible by 3).
    B = 8
    OBS_IN = 64        # raw obs feature dim fed to the synthetic obs_net
    O_DIM = 96         # obs_net.o_dim  -> hidden = 32
    STATE_DIM = 16
    N_ACTIONS = 32

    key = jax.random.PRNGKey(0)
    k_x, k_g, k_p = jax.random.split(key, 3)

    x = jax.random.normal(k_x, (B, OBS_IN), jnp.float32)
    latent_goal = jax.random.normal(k_g, (B, O_DIM), jnp.float32)

    params = init_params(k_p, OBS_IN, O_DIM, STATE_DIM, N_ACTIONS)
    prep = prepare_params(params, N_ACTIONS, STATE_DIM)

    # forward is called with state=None -> zeros(B, state_dim)
    logits, state_out = goal_nethack_actor(x, latent_goal, prep, state=None)
    logits = jax.block_until_ready(logits)

    ref = reference_forward(x, latent_goal, jnp.zeros((B, STATE_DIM), jnp.float32),
                            params)

    assert logits.shape == (B, N_ACTIONS)
    assert state_out.shape == (B, STATE_DIM)
    assert bool(jnp.all(state_out == 0.0))
    assert jnp.allclose(logits, ref, atol=2e-3, rtol=2e-3), "mismatch vs reference"

    # TODO(synk): the real obs_net is an arbitrary external nn.Module (NetHack
    # encoder); here it is a synthetic Linear+ReLU stand-in producing o_dim feats.
    print("KERNEL_OK")
</pallas_src>

<mosaic_0001>
module attributes {stable_mosaic.version = 11 : i64} {
  func.func @goal_actor_kernel(%arg0: i32, %arg1: memref<8x64xf32, #tpu.memory_space<vmem>>, %arg2: memref<8x96xf32, #tpu.memory_space<vmem>>, %arg3: memref<64x128xbf16, #tpu.memory_space<vmem>>, %arg4: memref<1x128xf32, #tpu.memory_space<vmem>>, %arg5: memref<128x128xbf16, #tpu.memory_space<vmem>>, %arg6: memref<1x128xf32, #tpu.memory_space<vmem>>, %arg7: memref<96x128xbf16, #tpu.memory_space<vmem>>, %arg8: memref<1x128xf32, #tpu.memory_space<vmem>>, %arg9: memref<256x128xbf16, #tpu.memory_space<vmem>>, %arg10: memref<1x128xf32, #tpu.memory_space<vmem>>, %arg11: memref<8x128xf32, #tpu.memory_space<vmem>>) attributes {dimension_semantics = [#tpu.dimension_semantics<parallel>], iteration_bounds = array<i64: 1>, scalar_prefetch = 0 : i64, scratch_operands = 0 : i64, tpu.core_type = #tpu.core_type<tc>, window_params = [{transform_indices = @transform_0, window_bounds = array<i64: 8, 64>}, {transform_indices = @transform_1, window_bounds = array<i64: 8, 96>}, {pipeline_mode = #tpu.pipeline_mode<synchronous>, transform_indices = @transform_2, window_bounds = array<i64: 64, 128>}, {pipeline_mode = #tpu.pipeline_mode<synchronous>, transform_indices = @transform_3, window_bounds = array<i64: 1, 128>}, {pipeline_mode = #tpu.pipeline_mode<synchronous>, transform_indices = @transform_4, window_bounds = array<i64: 128, 128>}, {pipeline_mode = #tpu.pipeline_mode<synchronous>, transform_indices = @transform_5, window_bounds = array<i64: 1, 128>}, {pipeline_mode = #tpu.pipeline_mode<synchronous>, transform_indices = @transform_6, window_bounds = array<i64: 96, 128>}, {pipeline_mode = #tpu.pipeline_mode<synchronous>, transform_indices = @transform_7, window_bounds = array<i64: 1, 128>}, {pipeline_mode = #tpu.pipeline_mode<synchronous>, transform_indices = @transform_8, window_bounds = array<i64: 256, 128>}, {pipeline_mode = #tpu.pipeline_mode<synchronous>, transform_indices = @transform_9, window_bounds = array<i64: 1, 128>}, {transform_indices = @transform_10, window_bounds = array<i64: 8, 128>}]} {
    %c0 = arith.constant 0 : index
    %c0_0 = arith.constant 0 : index
    %0 = vector.load %arg1[%c0, %c0_0] : memref<8x64xf32, #tpu.memory_space<vmem>>, vector<8x64xf32>
    %1 = arith.truncf %0 : vector<8x64xf32> to vector<8x64xbf16>
    %c0_1 = arith.constant 0 : index
    %c0_2 = arith.constant 0 : index
    %2 = vector.load %arg3[%c0_1, %c0_2] : memref<64x128xbf16, #tpu.memory_space<vmem>>, vector<64x128xbf16>
    %cst = arith.constant dense<0.000000e+00> : vector<8x128xf32>
    %3 = tpu.matmul %1, %2, %cst {dimension_numbers = #tpu.dot_dimension_numbers<[1], [0], [0], [1], [0, 0, 1, 1], [], []>} : vector<8x64xbf16>, vector<64x128xbf16>, vector<8x128xf32> -> vector<8x128xf32>
    %c0_3 = arith.constant 0 : index
    %c0_4 = arith.constant 0 : index
    %4 = vector.load %arg4[%c0_3, %c0_4] : memref<1x128xf32, #tpu.memory_space<vmem>>, vector<1x128xf32>
    %5 = vector.broadcast %4 : vector<1x128xf32> to vector<8x128xf32>
    %6 = arith.addf %3, %5 : vector<8x128xf32>
    %cst_5 = arith.constant 0.000000e+00 : f32
    %7 = vector.broadcast %cst_5 : f32 to vector<8x128xf32>
    %8 = arith.maximumf %6, %7 : vector<8x128xf32>
    %9 = arith.truncf %8 : vector<8x128xf32> to vector<8x128xbf16>
    %c0_6 = arith.constant 0 : index
    %c0_7 = arith.constant 0 : index
    %10 = vector.load %arg5[%c0_6, %c0_7] : memref<128x128xbf16, #tpu.memory_space<vmem>>, vector<128x128xbf16>
    %cst_8 = arith.constant dense<0.000000e+00> : vector<8x128xf32>
    %11 = tpu.matmul %9, %10, %cst_8 {dimension_numbers = #tpu.dot_dimension_numbers<[1], [0], [0], [1], [0, 0, 1, 1], [], []>} : vector<8x128xbf16>, vector<128x128xbf16>, vector<8x128xf32> -> vector<8x128xf32>
    %c0_9 = arith.constant 0 : index
    %c0_10 = arith.constant 0 : index
    %12 = vector.load %arg6[%c0_9, %c0_10] : memref<1x128xf32, #tpu.memory_space<vmem>>, vector<1x128xf32>
    %13 = vector.broadcast %12 : vector<1x128xf32> to vector<8x128xf32>
    %14 = arith.addf %11, %13 : vector<8x128xf32>
    %cst_11 = arith.constant 0.000000e+00 : f32
    %15 = vector.broadcast %cst_11 : f32 to vector<8x128xf32>
    %16 = arith.maximumf %14, %15 : vector<8x128xf32>
    %c0_12 = arith.constant 0 : index
    %c0_13 = arith.constant 0 : index
    %17 = vector.load %arg2[%c0_12, %c0_13] : memref<8x96xf32, #tpu.memory_space<vmem>>, vector<8x96xf32>
    %18 = arith.truncf %17 : vector<8x96xf32> to vector<8x96xbf16>
    %c0_14 = arith.constant 0 : index
    %c0_15 = arith.constant 0 : index
    %19 = vector.load %arg7[%c0_14, %c0_15] : memref<96x128xbf16, #tpu.memory_space<vmem>>, vector<96x128xbf16>
    %cst_16 = arith.constant dense<0.000000e+00> : vector<8x128xf32>
    %20 = tpu.matmul %18, %19, %cst_16 {dimension_numbers = #tpu.dot_dimension_numbers<[1], [0], [0], [1], [0, 0, 1, 1], [], []>} : vector<8x96xbf16>, vector<96x128xbf16>, vector<8x128xf32> -> vector<8x128xf32>
    %c0_17 = arith.constant 0 : index
    %c0_18 = arith.constant 0 : index
    %21 = vector.load %arg8[%c0_17, %c0_18] : memref<1x128xf32, #tpu.memory_space<vmem>>, vector<1x128xf32>
    %22 = vector.broadcast %21 : vector<1x128xf32> to vector<8x128xf32>
    %23 = arith.addf %20, %22 : vector<8x128xf32>
    %cst_19 = arith.constant 0.000000e+00 : f32
    %24 = vector.broadcast %cst_19 : f32 to vector<8x128xf32>
    %25 = arith.maximumf %23, %24 : vector<8x128xf32>
    %26 = tpu.concatenate %16, %25 in 1 : vector<8x128xf32>, vector<8x128xf32> -> vector<8x256xf32>
    %27 = arith.truncf %26 : vector<8x256xf32> to vector<8x256xbf16>
    %c0_20 = arith.constant 0 : index
    %c0_21 = arith.constant 0 : index
    %28 = vector.load %arg9[%c0_20, %c0_21] : memref<256x128xbf16, #tpu.memory_space<vmem>>, vector<256x128xbf16>
    %cst_22 = arith.constant dense<0.000000e+00> : vector<8x128xf32>
    %29 = tpu.matmul %27, %28, %cst_22 {dimension_numbers = #tpu.dot_dimension_numbers<[1], [0], [0], [1], [0, 0, 1, 1], [], []>} : vector<8x256xbf16>, vector<256x128xbf16>, vector<8x128xf32> -> vector<8x128xf32>
    %c0_23 = arith.constant 0 : index
    %c0_24 = arith.constant 0 : index
    %30 = vector.load %arg10[%c0_23, %c0_24] : memref<1x128xf32, #tpu.memory_space<vmem>>, vector<1x128xf32>
    %31 = vector.broadcast %30 : vector<1x128xf32> to vector<8x128xf32>
    %32 = arith.addf %29, %31 : vector<8x128xf32>
    %c0_25 = arith.constant 0 : index
    %c0_26 = arith.constant 0 : index
    %33 = vector.load %arg11[%c0_25, %c0_26] : memref<8x128xf32, #tpu.memory_space<vmem>>, vector<8x128xf32>
    tpu.vector_store %arg11[%c0_25, %c0_26], %32 {strides = array<i32>} : memref<8x128xf32, #tpu.memory_space<vmem>>, vector<8x128xf32>,
    return
  }
  func.func @transform_0(%arg0: i32) -> (i32, i32) {
    %c0_i32 = arith.constant 0 : i32
    %c0_i32_0 = arith.constant 0 : i32
    return %arg0, %c0_i32 : i32, i32
  }
  func.func @transform_1(%arg0: i32) -> (i32, i32) {
    %c0_i32 = arith.constant 0 : i32
    %c0_i32_0 = arith.constant 0 : i32
    return %arg0, %c0_i32 : i32, i32
  }
  func.func @transform_2(%arg0: i32) -> (i32, i32) {
    %c0_i32 = arith.constant 0 : i32
    %c0_i32_0 = arith.constant 0 : i32
    %c0_i32_1 = arith.constant 0 : i32
    return %c0_i32, %c0_i32_0 : i32, i32
  }
  func.func @transform_3(%arg0: i32) -> (i32, i32) {
    %c0_i32 = arith.constant 0 : i32
    %c0_i32_0 = arith.constant 0 : i32
    %c0_i32_1 = arith.constant 0 : i32
    return %c0_i32, %c0_i32_0 : i32, i32
  }
  func.func @transform_4(%arg0: i32) -> (i32, i32) {
    %c0_i32 = arith.constant 0 : i32
    %c0_i32_0 = arith.constant 0 : i32
    %c0_i32_1 = arith.constant 0 : i32
    return %c0_i32, %c0_i32_0 : i32, i32
  }
  func.func @transform_5(%arg0: i32) -> (i32, i32) {
    %c0_i32 = arith.constant 0 : i32
    %c0_i32_0 = arith.constant 0 : i32
    %c0_i32_1 = arith.constant 0 : i32
    return %c0_i32, %c0_i32_0 : i32, i32
  }
  func.func @transform_6(%arg0: i32) -> (i32, i32) {
    %c0_i32 = arith.constant 0 : i32
    %c0_i32_0 = arith.constant 0 : i32
    %c0_i32_1 = arith.constant 0 : i32
    return %c0_i32, %c0_i32_0 : i32, i32
  }
  func.func @transform_7(%arg0: i32) -> (i32, i32) {
    %c0_i32 = arith.constant 0 : i32
    %c0_i32_0 = arith.constant 0 : i32
    %c0_i32_1 = arith.constant 0 : i32
    return %c0_i32, %c0_i32_0 : i32, i32
  }
  func.func @transform_8(%arg0: i32) -> (i32, i32) {
    %c0_i32 = arith.constant 0 : i32
    %c0_i32_0 = arith.constant 0 : i32
    %c0_i32_1 = arith.constant 0 : i32
    return %c0_i32, %c0_i32_0 : i32, i32
  }
  func.func @transform_9(%arg0: i32) -> (i32, i32) {
    %c0_i32 = arith.constant 0 : i32
    %c0_i32_0 = arith.constant 0 : i32
    %c0_i32_1 = arith.constant 0 : i32
    return %c0_i32, %c0_i32_0 : i32, i32
  }
  func.func @transform_10(%arg0: i32) -> (i32, i32) {
    %c0_i32 = arith.constant 0 : i32
    %c0_i32_0 = arith.constant 0 : i32
    return %arg0, %c0_i32 : i32, i32
  }
}

</mosaic_0001>

<llo_original>
// kernel: tpu_custom_call.1
$region0: #{tpu_custom_call.1}
  #allocation0 [shape = 'u32[]', space=smem, size = 0x4, offset = 0x4, fixed_abs, tag = 'smem constant byte address 0x4 - core index']
  #allocation1 [shape = 'u32[144,128]{1,0:T(1,128)}', space=vmem, size = 0x12000, scoped, tag = 'internal scratch']
  %s0 = inlined_call_operand.hbm [shape: f32[8,64], index: 0, kind: input, shape index: {}]
  %s1 = inlined_call_operand.hbm [shape: f32[8,96], index: 1, kind: input, shape index: {}]
  %s2 = inlined_call_operand.hbm [shape: bf16[64,128], index: 2, kind: input, shape index: {}]
  %s3 = inlined_call_operand.vmem [shape: f32[1,128], index: 3, kind: input, shape index: {}]
  %s4 = inlined_call_operand.hbm [shape: bf16[128,128], index: 4, kind: input, shape index: {}]
  %s5 = inlined_call_operand.vmem [shape: f32[1,128], index: 5, kind: input, shape index: {}]
  %s6 = inlined_call_operand.hbm [shape: bf16[96,128], index: 6, kind: input, shape index: {}]
  %s7 = inlined_call_operand.vmem [shape: f32[1,128], index: 7, kind: input, shape index: {}]
  %s8 = inlined_call_operand.hbm [shape: bf16[256,128], index: 8, kind: input, shape index: {}]
  %s9 = inlined_call_operand.vmem [shape: f32[1,128], index: 9, kind: input, shape index: {}]
  %s10 = inlined_call_operand.hbm [shape: f32[8,128], index: 10, kind: output, shape index: {}]
  %s11 = sld [smem:[#allocation0]]
  $region74: #{tpu_custom_call.1} parent=0
    _
  %s13 = ssub.s32 1, %s11
  %s14 = scalar_select 0, %s13, %s11
  $region1: #{tpu_custom_call.1} parent=0
    #allocation2 [shape = 'u8[4096]{0}', space=vmem, size = 0x1000, scoped, tag = 'input window, operand 0, single buffered']
    #allocation3 [shape = 's32[1]{0}', space=sflag, size = 0x4, scoped, tag = 'scoped memory for tpu_custom_call.1']
    #allocation4 [shape = 's32[1]{0}', space=sflag, size = 0x4, scoped, tag = 'scoped memory for tpu_custom_call.1']
    #allocation5 [shape = 'u8[4096]{0}', space=vmem, size = 0x1000, scoped, tag = 'input window, operand 1, single buffered']
    #allocation6 [shape = 's32[1]{0}', space=sflag, size = 0x4, scoped, tag = 'scoped memory for tpu_custom_call.1']
    #allocation7 [shape = 'u8[16384]{0}', space=vmem, size = 0x4000, scoped, tag = 'input window, operand 2, single buffered']
    #allocation8 [shape = 'u8[32768]{0}', space=vmem, size = 0x8000, scoped, tag = 'input window, operand 4, single buffered']
    #allocation9 [shape = 's32[1]{0}', space=sflag, size = 0x4, scoped, tag = 'scoped memory for tpu_custom_call.1']
    #allocation10 [shape = 'u8[24576]{0}', space=vmem, size = 0x6000, scoped, tag = 'input window, operand 6, single buffered']
    #allocation11 [shape = 'u8[65536]{0}', space=vmem, size = 0x10000, scoped, tag = 'input window, operand 8, single buffered']
    #allocation12 [shape = 's32[1]{0}', space=sflag, size = 0x4, scoped, tag = 'scoped memory for tpu_custom_call.1']
    #allocation13 [shape = 'u8[4096]{0}', space=vmem, size = 0x1000, scoped, tag = 'output window, operand 0, single buffered']
    %15 = vsyncpa [#allocation3], 0
    %16 = vsyncpa [#allocation6], 0
    %17 = vsyncpa [#allocation9], 0
    %18 = vsyncpa [#allocation12], 0
    %19 = vsyncpa [#allocation4], 0
    // Predicated region
    $region2: #{tpu_custom_call.1} parent=1 // pred_check
      _
    $region3: #{tpu_custom_call.1} parent=1 // pred_check_branch
      %21 = sbr.rel (0) target = $region5
    $region4: #{tpu_custom_call.1} parent=1 // pred_region
      %s23 = ssub.s32 128, 128
      %24 = vsyncadd [#allocation3], %s23
      %s26 = sshll.u32 [#allocation2], 4
      %s27 = int_to_ptr.vmem [resolvable:$true] %s26
      %29 = dma.hbm_to_vmem [thread:$0]  %s0, 128, %s27, [#allocation3]
    $region5: #{tpu_custom_call.1} parent=1 // pred_fallthru
      _
    // Predicated region
    $region6: #{tpu_custom_call.1} parent=1 // pred_check
      _
    $region7: #{tpu_custom_call.1} parent=1 // pred_check_branch
      %31 = sbr.rel (0) target = $region9
    $region8: #{tpu_custom_call.1} parent=1 // pred_region
      %s33 = ssub.s32 128, 128
      %34 = vsyncadd [#allocation6], %s33
      %s36 = sshll.u32 [#allocation5], 4
      %s37 = int_to_ptr.vmem [resolvable:$true] %s36
      %39 = dma.hbm_to_vmem [thread:$0]  %s1, 128, %s37, [#allocation6]
    $region9: #{tpu_custom_call.1} parent=1 // pred_fallthru
      _
    // Predicated region
    $region10: #{tpu_custom_call.1} parent=1 // pred_check
      _
    $region11: #{tpu_custom_call.1} parent=1 // pred_check_branch
      %41 = sbr.rel (0) target = $region13
    $region12: #{tpu_custom_call.1} parent=1 // pred_region
      %s43 = ssub.s32 512, 512
      %44 = vsyncadd [#allocation6], %s43
      %s45 = sshll.u32 [#allocation7], 4
      %s46 = int_to_ptr.vmem [resolvable:$true] %s45
      %51 = dma.hbm_to_vmem [thread:$0]  %s2, 512, %s46, [#allocation6], 64, 64, 4
    $region13: #{tpu_custom_call.1} parent=1 // pred_fallthru
      _
    // Predicated region
    $region14: #{tpu_custom_call.1} parent=1 // pred_check
      _
    $region15: #{tpu_custom_call.1} parent=1 // pred_check_branch
      %53 = sbr.rel (0) target = $region17
    $region16: #{tpu_custom_call.1} parent=1 // pred_region
      _
    $region17: #{tpu_custom_call.1} parent=1 // pred_fallthru
      _
    // Predicated region
    $region18: #{tpu_custom_call.1} parent=1 // pred_check
      _
    $region19: #{tpu_custom_call.1} parent=1 // pred_check_branch
      %55 = sbr.rel (0) target = $region21
    $region20: #{tpu_custom_call.1} parent=1 // pred_region
      %s57 = ssub.s32 1024, 1024
      %58 = vsyncadd [#allocation9], %s57
      %s59 = sshll.u32 [#allocation8], 4
      %s60 = int_to_ptr.vmem [resolvable:$true] %s59
      %65 = dma.hbm_to_vmem [thread:$0]  %s4, 1024, %s60, [#allocation9], 64, 64, 4
    $region21: #{tpu_custom_call.1} parent=1 // pred_fallthru
      _
    // Predicated region
    $region22: #{tpu_custom_call.1} parent=1 // pred_check
      _
    $region23: #{tpu_custom_call.1} parent=1 // pred_check_branch
      %67 = sbr.rel (0) target = $region25
    $region24: #{tpu_custom_call.1} parent=1 // pred_region
      _
    $region25: #{tpu_custom_call.1} parent=1 // pred_fallthru
      _
    // Predicated region
    $region26: #{tpu_custom_call.1} parent=1 // pred_check
      _
    $region27: #{tpu_custom_call.1} parent=1 // pred_check_branch
      %69 = sbr.rel (0) target = $region29
    $region28: #{tpu_custom_call.1} parent=1 // pred_region
      %s71 = ssub.s32 768, 768
      %72 = vsyncadd [#allocation9], %s71
      %s73 = sshll.u32 [#allocation10], 4
      %s74 = int_to_ptr.vmem [resolvable:$true] %s73
      %79 = dma.hbm_to_vmem [thread:$0]  %s6, 768, %s74, [#allocation9], 64, 64, 4
    $region29: #{tpu_custom_call.1} parent=1 // pred_fallthru
      _
    // Predicated region
    $region30: #{tpu_custom_call.1} parent=1 // pred_check
      _
    $region31: #{tpu_custom_call.1} parent=1 // pred_check_branch
      %81 = sbr.rel (0) target = $region33
    $region32: #{tpu_custom_call.1} parent=1 // pred_region
      _
    $region33: #{tpu_custom_call.1} parent=1 // pred_fallthru
      _
    // Predicated region
    $region34: #{tpu_custom_call.1} parent=1 // pred_check
      _
    $region35: #{tpu_custom_call.1} parent=1 // pred_check_branch
      %83 = sbr.rel (0) target = $region37
    $region36: #{tpu_custom_call.1} parent=1 // pred_region
      %s85 = ssub.s32 2048, 2048
      %86 = vsyncadd [#allocation12], %s85
      %s87 = sshll.u32 [#allocation11], 4
      %s88 = int_to_ptr.vmem [resolvable:$true] %s87
      %93 = dma.hbm_to_vmem [thread:$0]  %s8, 2048, %s88, [#allocation12], 64, 64, 4
    $region37: #{tpu_custom_call.1} parent=1 // pred_fallthru
      _
    // Predicated region
    $region38: #{tpu_custom_call.1} parent=1 // pred_check
      _
    $region39: #{tpu_custom_call.1} parent=1 // pred_check_branch
      %95 = sbr.rel (0) target = $region41
    $region40: #{tpu_custom_call.1} parent=1 // pred_region
      _
    $region41: #{tpu_custom_call.1} parent=1 // pred_fallthru
      _
    // Predicated region
    $region42: #{tpu_custom_call.1} parent=1 // pred_check
      _
    $region43: #{tpu_custom_call.1} parent=1 // pred_check_branch
      %97 = sbr.rel (0) target = $region45
    $region44: #{tpu_custom_call.1} parent=1 // pred_region
      %98 = dma.done [#allocation3], 128
    $region45: #{tpu_custom_call.1} parent=1 // pred_fallthru
      _
    // Predicated region
    $region46: #{tpu_custom_call.1} parent=1 // pred_check
      _
    $region47: #{tpu_custom_call.1} parent=1 // pred_check_branch
      %100 = sbr.rel (0) target = $region49
    $region48: #{tpu_custom_call.1} parent=1 // pred_region
      %101 = dma.done [#allocation6], 128
    $region49: #{tpu_custom_call.1} parent=1 // pred_fallthru
      _
    // Predicated region
    $region50: #{tpu_custom_call.1} parent=1 // pred_check
      _
    $region51: #{tpu_custom_call.1} parent=1 // pred_check_branch
      %103 = sbr.rel (0) target = $region53
    $region52: #{tpu_custom_call.1} parent=1 // pred_region
      %104 = dma.done [#allocation6], 512
    $region53: #{tpu_custom_call.1} parent=1 // pred_fallthru
      _
    // Predicated region
    $region54: #{tpu_custom_call.1} parent=1 // pred_check
      _
    $region55: #{tpu_custom_call.1} parent=1 // pred_check_branch
      %106 = sbr.rel (0) target = $region57
    $region56: #{tpu_custom_call.1} parent=1 // pred_region
      %107 = dma.done [#allocation9], 1024
    $region57: #{tpu_custom_call.1} parent=1 // pred_fallthru
      _
    // Predicated region
    $region58: #{tpu_custom_call.1} parent=1 // pred_check
      _
    $region59: #{tpu_custom_call.1} parent=1 // pred_check_branch
      %109 = sbr.rel (0) target = $region61
    $region60: #{tpu_custom_call.1} parent=1 // pred_region
      %110 = dma.done [#allocation9], 768
    $region61: #{tpu_custom_call.1} parent=1 // pred_fallthru
      _
    // Predicated region
    $region62: #{tpu_custom_call.1} parent=1 // pred_check
      _
    $region63: #{tpu_custom_call.1} parent=1 // pred_check_branch
      %112 = sbr.rel (0) target = $region65
    $region64: #{tpu_custom_call.1} parent=1 // pred_region
      %113 = dma.done [#allocation12], 2048
    $region65: #{tpu_custom_call.1} parent=1 // pred_fallthru
      _
    %v115 = vld [vmem:[#allocation2] sm:$0xff]
    %v116 = vpack.c.bf16 %v115, %v115
    %v117 = vld [vmem:[#allocation7] sm:$0xf]
    %v118 = vld [vmem:[#allocation7 + $0x4] sm:$0xf]
    %v119 = vld [vmem:[#allocation7 + $0x8] sm:$0xf]
    %v120 = vld [vmem:[#allocation7 + $0xc] sm:$0xf]
    %v121 = vld [vmem:[#allocation7 + $0x10] sm:$0xf]
    %v122 = vld [vmem:[#allocation7 + $0x14] sm:$0xf]
    %v123 = vld [vmem:[#allocation7 + $0x18] sm:$0xf]
    %v124 = vld [vmem:[#allocation7 + $0x1c] sm:$0xf]
    %v125 = vld [vmem:[%s3] sm:$0x1]
    %v127 = vlaneseq
    %v128 = vshrl.u32 %v127, 7
    %v129 = vsub.s32 0, %v128
    %v130 = vrot.slane %v125, %v129
    %v140 = vunpack.c.l.b16 %v117
    %v141 = vunpack.c.l.b16 %v118
    %v142 = vunpack.c.l.b16 %v119
    %v143 = vunpack.c.l.b16 %v120
    %v144 = vunpack.c.l.b16 %v121
    %v145 = vunpack.c.l.b16 %v122
    %v146 = vunpack.c.l.b16 %v123
    %v147 = vunpack.c.l.b16 %v124
    %v148 = vpack.c.b16 %v141, %v140
    %v149 = vpack.c.b16 %v143, %v142
    %v150 = vpack.c.b16 %v145, %v144
    %v151 = vpack.c.b16 %v147, %v146
    %vm156 = vcmask 523264
    %v158 = vsel %vm156, %v116, 0
    %160 = vmatprep.subr.bf16.mxu0 0
    %161 = vmatpush1.bf16.msra.mxu0 %v148
    %162 = vmatprep.subr.bf16.mxu0 0
    %163 = vmatpush1.bf16.msra.mxu0 %v149
    %164 = vmatprep.subr.bf16.mxu0 0
    %165 = vmatpush1.bf16.msra.mxu0 %v150
    %166 = vmatprep.subr.bf16.mxu0 0
    %167 = vmatpush1.bf16.msra.mxu0 %v151
    %168 = vmatprep.subr.bf16.mxu0 0
    %169 = vmatpush1.bf16.msra.mxu0 0
    %170 = vmatprep.subr.bf16.mxu0 0
    %171 = vmatpush1.bf16.msra.mxu0 0
    %172 = vmatprep.subr.bf16.mxu0 0
    %173 = vmatpush1.bf16.msra.mxu0 0
    %174 = vmatprep.subr.bf16.mxu0 0
    %175 = vmatpush1.bf16.msra.mxu0 0
    %176 = vmatprep.subr.bf16.mxu0 0
    %177 = vmatpush1.bf16.msra.mxu0 0
    %178 = vmatprep.subr.bf16.mxu0 0
    %179 = vmatpush1.bf16.msra.mxu0 0
    %180 = vmatprep.subr.bf16.mxu0 0
    %181 = vmatpush1.bf16.msra.mxu0 0
    %182 = vmatprep.subr.bf16.mxu0 0
    %183 = vmatpush1.bf16.msra.mxu0 0
    %184 = vmatprep.subr.bf16.mxu0 0
    %185 = vmatpush1.bf16.msra.mxu0 0
    %186 = vmatprep.subr.bf16.mxu0 0
    %187 = vmatpush1.bf16.msra.mxu0 0
    %188 = vmatprep.subr.bf16.mxu0 0
    %189 = vmatpush1.bf16.msra.mxu0 0
    %190 = vmatprep.subr.bf16.mxu0 0
    %191 = vmatpush1.bf16.msra.mxu0 0
    %192 = vmatprep.mubr.bf16.mxu0 0
    %193 = vmatmul.mubr.bf16.gmra.mrb[0].mxu0 %v158
    %v194 = vpop.f32.mrb[0].mxu0
    %v195 = vadd.f32 %v130, %v194
    %v196 = vpop.f32.mrb[0].mxu0
    %v197 = vpop.f32.mrb[0].mxu0
    %v198 = vpop.f32.mrb[0].mxu0
    %199 = vdwg.mxu0
    %v200 = vmax.f32 %v195, 0.0
    %v201 = vpack.c.bf16 %v200, %v200
    %v202 = vld [vmem:[#allocation8] sm:$0xf]
    %v203 = vld [vmem:[#allocation8 + $0x4] sm:$0xf]
    %v204 = vld [vmem:[#allocation8 + $0x8] sm:$0xf]
    %v205 = vld [vmem:[#allocation8 + $0xc] sm:$0xf]
    %v206 = vld [vmem:[#allocation8 + $0x10] sm:$0xf]
    %v207 = vld [vmem:[#allocation8 + $0x14] sm:$0xf]
    %v208 = vld [vmem:[#allocation8 + $0x18] sm:$0xf]
    %v209 = vld [vmem:[#allocation8 + $0x1c] sm:$0xf]
    %v210 = vld [vmem:[#allocation8 + $0x20] sm:$0xf]
    %v211 = vld [vmem:[#allocation8 + $0x24] sm:$0xf]
    %v212 = vld [vmem:[#allocation8 + $0x28] sm:$0xf]
    %v213 = vld [vmem:[#allocation8 + $0x2c] sm:$0xf]
    %v214 = vld [vmem:[#allocation8 + $0x30] sm:$0xf]
    %v215 = vld [vmem:[#allocation8 + $0x34] sm:$0xf]
    %v216 = vld [vmem:[#allocation8 + $0x38] sm:$0xf]
    %v217 = vld [vmem:[#allocation8 + $0x3c] sm:$0xf]
    %v218 = vld [vmem:[%s5] sm:$0x1]
    %v220 = vlaneseq
    %v221 = vshrl.u32 %v220, 7
    %v222 = vsub.s32 0, %v221
    %v223 = vrot.slane %v218, %v222
    %v241 = vunpack.c.l.b16 %v202
    %v242 = vunpack.c.l.b16 %v203
    %v243 = vunpack.c.l.b16 %v204
    %v244 = vunpack.c.l.b16 %v205
    %v245 = vunpack.c.l.b16 %v206
    %v246 = vunpack.c.l.b16 %v207
    %v247 = vunpack.c.l.b16 %v208
    %v248 = vunpack.c.l.b16 %v209
    %v249 = vunpack.c.l.b16 %v210
    %v250 = vunpack.c.l.b16 %v211
    %v251 = vunpack.c.l.b16 %v212
    %v252 = vunpack.c.l.b16 %v213
    %v253 = vunpack.c.l.b16 %v214
    %v254 = vunpack.c.l.b16 %v215
    %v255 = vunpack.c.l.b16 %v216
    %v256 = vunpack.c.l.b16 %v217
    %v257 = vpack.c.b16 %v242, %v241
    %v258 = vpack.c.b16 %v244, %v243
    %v259 = vpack.c.b16 %v246, %v245
    %v260 = vpack.c.b16 %v248, %v247
    %v261 = vpack.c.b16 %v250, %v249
    %v262 = vpack.c.b16 %v252, %v251
    %v263 = vpack.c.b16 %v254, %v253
    %v264 = vpack.c.b16 %v256, %v255
    %273 = vmatprep.subr.bf16.mxu0 0
    %274 = vmatpush1.bf16.msra.mxu0 %v257
    %275 = vmatprep.subr.bf16.mxu0 0
    %276 = vmatpush1.bf16.msra.mxu0 %v258
    %277 = vmatprep.subr.bf16.mxu0 0
    %278 = vmatpush1.bf16.msra.mxu0 %v259
    %279 = vmatprep.subr.bf16.mxu0 0
    %280 = vmatpush1.bf16.msra.mxu0 %v260
    %281 = vmatprep.subr.bf16.mxu0 0
    %282 = vmatpush1.bf16.msra.mxu0 %v261
    %283 = vmatprep.subr.bf16.mxu0 0
    %284 = vmatpush1.bf16.msra.mxu0 %v262
    %285 = vmatprep.subr.bf16.mxu0 0
    %286 = vmatpush1.bf16.msra.mxu0 %v263
    %287 = vmatprep.subr.bf16.mxu0 0
    %288 = vmatpush1.bf16.msra.mxu0 %v264
    %289 = vmatprep.subr.bf16.mxu0 0
    %290 = vmatpush1.bf16.msra.mxu0 0
    %291 = vmatprep.subr.bf16.mxu0 0
    %292 = vmatpush1.bf16.msra.mxu0 0
    %293 = vmatprep.subr.bf16.mxu0 0
    %294 = vmatpush1.bf16.msra.mxu0 0
    %295 = vmatprep.subr.bf16.mxu0 0
    %296 = vmatpush1.bf16.msra.mxu0 0
    %297 = vmatprep.subr.bf16.mxu0 0
    %298 = vmatpush1.bf16.msra.mxu0 0
    %299 = vmatprep.subr.bf16.mxu0 0
    %300 = vmatpush1.bf16.msra.mxu0 0
    %301 = vmatprep.subr.bf16.mxu0 0
    %302 = vmatpush1.bf16.msra.mxu0 0
    %303 = vmatprep.subr.bf16.mxu0 0
    %304 = vmatpush1.bf16.msra.mxu0 0
    %305 = vmatprep.mubr.bf16.mxu0 0
    %306 = vmatmul.mubr.bf16.gmra.mrb[0].mxu0 %v201
    %v307 = vpop.f32.mrb[0].mxu0
    %v308 = vadd.f32 %v223, %v307
    %v309 = vpop.f32.mrb[0].mxu0
    %v310 = vpop.f32.mrb[0].mxu0
    %v311 = vpop.f32.mrb[0].mxu0
    %312 = vdwg.mxu0
    %v313 = vmax.f32 %v308, 0.0
    %v314 = vld [vmem:[#allocation5] sm:$0xff]
    %v315 = vpack.c.bf16 %v314, %v314
    %v316 = vld [vmem:[#allocation10] sm:$0xf]
    %v317 = vld [vmem:[#allocation10 + $0x4] sm:$0xf]
    %v318 = vld [vmem:[#allocation10 + $0x8] sm:$0xf]
    %v319 = vld [vmem:[#allocation10 + $0xc] sm:$0xf]
    %v320 = vld [vmem:[#allocation10 + $0x10] sm:$0xf]
    %v321 = vld [vmem:[#allocation10 + $0x14] sm:$0xf]
    %v322 = vld [vmem:[#allocation10 + $0x18] sm:$0xf]
    %v323 = vld [vmem:[#allocation10 + $0x1c] sm:$0xf]
    %v324 = vld [vmem:[#allocation10 + $0x20] sm:$0xf]
    %v325 = vld [vmem:[#allocation10 + $0x24] sm:$0xf]
    %v326 = vld [vmem:[#allocation10 + $0x28] sm:$0xf]
    %v327 = vld [vmem:[#allocation10 + $0x2c] sm:$0xf]
    %v328 = vld [vmem:[%s7] sm:$0x1]
    %v330 = vlaneseq
    %v331 = vshrl.u32 %v330, 7
    %v332 = vsub.s32 0, %v331
    %v333 = vrot.slane %v328, %v332
    %v347 = vunpack.c.l.b16 %v316
    %v348 = vunpack.c.l.b16 %v317
    %v349 = vunpack.c.l.b16 %v318
    %v350 = vunpack.c.l.b16 %v319
    %v351 = vunpack.c.l.b16 %v320
    %v352 = vunpack.c.l.b16 %v321
    %v353 = vunpack.c.l.b16 %v322
    %v354 = vunpack.c.l.b16 %v323
    %v355 = vunpack.c.l.b16 %v324
    %v356 = vunpack.c.l.b16 %v325
    %v357 = vunpack.c.l.b16 %v326
    %v358 = vunpack.c.l.b16 %v327
    %v359 = vpack.c.b16 %v348, %v347
    %v360 = vpack.c.b16 %v350, %v349
    %v361 = vpack.c.b16 %v352, %v351
    %v362 = vpack.c.b16 %v354, %v353
    %v363 = vpack.c.b16 %v356, %v355
    %v364 = vpack.c.b16 %v358, %v357
    %vm371 = vcmask 785408
    %v373 = vsel %vm371, %v315, 0
    %375 = vmatprep.subr.bf16.mxu0 0
    %376 = vmatpush1.bf16.msra.mxu0 %v359
    %377 = vmatprep.subr.bf16.mxu0 0
    %378 = vmatpush1.bf16.msra.mxu0 %v360
    %379 = vmatprep.subr.bf16.mxu0 0
    %380 = vmatpush1.bf16.msra.mxu0 %v361
    %381 = vmatprep.subr.bf16.mxu0 0
    %382 = vmatpush1.bf16.msra.mxu0 %v362
    %383 = vmatprep.subr.bf16.mxu0 0
    %384 = vmatpush1.bf16.msra.mxu0 %v363
    %385 = vmatprep.subr.bf16.mxu0 0
    %386 = vmatpush1.bf16.msra.mxu0 %v364
    %387 = vmatprep.subr.bf16.mxu0 0
    %388 = vmatpush1.bf16.msra.mxu0 0
    %389 = vmatprep.subr.bf16.mxu0 0
    %390 = vmatpush1.bf16.msra.mxu0 0
    %391 = vmatprep.subr.bf16.mxu0 0
    %392 = vmatpush1.bf16.msra.mxu0 0
    %393 = vmatprep.subr.bf16.mxu0 0
    %394 = vmatpush1.bf16.msra.mxu0 0
    %395 = vmatprep.subr.bf16.mxu0 0
    %396 = vmatpush1.bf16.msra.mxu0 0
    %397 = vmatprep.subr.bf16.mxu0 0
    %398 = vmatpush1.bf16.msra.mxu0 0
    %399 = vmatprep.subr.bf16.mxu0 0
    %400 = vmatpush1.bf16.msra.mxu0 0
    %401 = vmatprep.subr.bf16.mxu0 0
    %402 = vmatpush1.bf16.msra.mxu0 0
    %403 = vmatprep.subr.bf16.mxu0 0
    %404 = vmatpush1.bf16.msra.mxu0 0
    %405 = vmatprep.subr.bf16.mxu0 0
    %406 = vmatpush1.bf16.msra.mxu0 0
    %407 = vmatprep.mubr.bf16.mxu0 0
    %408 = vmatmul.mubr.bf16.gmra.mrb[0].mxu0 %v373
    %v409 = vpop.f32.mrb[0].mxu0
    %v410 = vadd.f32 %v333, %v409
    %v411 = vpop.f32.mrb[0].mxu0
    %v412 = vpop.f32.mrb[0].mxu0
    %v413 = vpop.f32.mrb[0].mxu0
    %414 = vdwg.mxu0
    %v415 = vmax.f32 %v410, 0.0
    %v416 = vpack.c.bf16 %v313, %v313
    %v417 = vpack.c.bf16 %v415, %v415
    %v418 = vld [vmem:[#allocation11] sm:$0xf]
    %v419 = vld [vmem:[#allocation11 + $0x4] sm:$0xf]
    %v420 = vld [vmem:[#allocation11 + $0x8] sm:$0xf]
    %v421 = vld [vmem:[#allocation11 + $0xc] sm:$0xf]
    %v422 = vld [vmem:[#allocation11 + $0x10] sm:$0xf]
    %v423 = vld [vmem:[#allocation11 + $0x14] sm:$0xf]
    %v424 = vld [vmem:[#allocation11 + $0x18] sm:$0xf]
    %v425 = vld [vmem:[#allocation11 + $0x1c] sm:$0xf]
    %v426 = vld [vmem:[#allocation11 + $0x20] sm:$0xf]
    %v427 = vld [vmem:[#allocation11 + $0x24] sm:$0xf]
    %v428 = vld [vmem:[#allocation11 + $0x28] sm:$0xf]
    %v429 = vld [vmem:[#allocation11 + $0x2c] sm:$0xf]
    %v430 = vld [vmem:[#allocation11 + $0x30] sm:$0xf]
    %v431 = vld [vmem:[#allocation11 + $0x34] sm:$0xf]
    %v432 = vld [vmem:[#allocation11 + $0x38] sm:$0xf]
    %v433 = vld [vmem:[#allocation11 + $0x3c] sm:$0xf]
    %v434 = vld [vmem:[#allocation11 + $0x40] sm:$0xf]
    %v435 = vld [vmem:[#allocation11 + $0x44] sm:$0xf]
    %v436 = vld [vmem:[#allocation11 + $0x48] sm:$0xf]
    %v437 = vld [vmem:[#allocation11 + $0x4c] sm:$0xf]
    %v438 = vld [vmem:[#allocation11 + $0x50] sm:$0xf]
    %v439 = vld [vmem:[#allocation11 + $0x54] sm:$0xf]
    %v440 = vld [vmem:[#allocation11 + $0x58] sm:$0xf]
    %v441 = vld [vmem:[#allocation11 + $0x5c] sm:$0xf]
    %v442 = vld [vmem:[#allocation11 + $0x60] sm:$0xf]
    %v443 = vld [vmem:[#allocation11 + $0x64] sm:$0xf]
    %v444 = vld [vmem:[#allocation11 + $0x68] sm:$0xf]
    %v445 = vld [vmem:[#allocation11 + $0x6c] sm:$0xf]
    %v446 = vld [vmem:[#allocation11 + $0x70] sm:$0xf]
    %v447 = vld [vmem:[#allocation11 + $0x74] sm:$0xf]
    %v448 = vld [vmem:[#allocation11 + $0x78] sm:$0xf]
    %v449 = vld [vmem:[#allocation11 + $0x7c] sm:$0xf]
    %v450 = vld [vmem:[%s9] sm:$0x1]
    %v452 = vlaneseq
    %v453 = vshrl.u32 %v452, 7
    %v454 = vsub.s32 0, %v453
    %v455 = vrot.slane %v450, %v454
    %v489 = vunpack.c.l.b16 %v418
    %v490 = vunpack.c.l.b16 %v419
    %v491 = vunpack.c.l.b16 %v420
    %v492 = vunpack.c.l.b16 %v421
    %v493 = vunpack.c.l.b16 %v422
    %v494 = vunpack.c.l.b16 %v423
    %v495 = vunpack.c.l.b16 %v424
    %v496 = vunpack.c.l.b16 %v425
    %v497 = vunpack.c.l.b16 %v426
    %v498 = vunpack.c.l.b16 %v427
    %v499 = vunpack.c.l.b16 %v428
    %v500 = vunpack.c.l.b16 %v429
    %v501 = vunpack.c.l.b16 %v430
    %v502 = vunpack.c.l.b16 %v431
    %v503 = vunpack.c.l.b16 %v432
    %v504 = vunpack.c.l.b16 %v433
    %v505 = vunpack.c.l.b16 %v434
    %v506 = vunpack.c.l.b16 %v435
    %v507 = vunpack.c.l.b16 %v436
    %v508 = vunpack.c.l.b16 %v437
    %v509 = vunpack.c.l.b16 %v438
    %v510 = vunpack.c.l.b16 %v439
    %v511 = vunpack.c.l.b16 %v440
    %v512 = vunpack.c.l.b16 %v441
    %v513 = vunpack.c.l.b16 %v442
    %v514 = vunpack.c.l.b16 %v443
    %v515 = vunpack.c.l.b16 %v444
    %v516 = vunpack.c.l.b16 %v445
    %v517 = vunpack.c.l.b16 %v446
    %v518 = vunpack.c.l.b16 %v447
    %v519 = vunpack.c.l.b16 %v448
    %v520 = vunpack.c.l.b16 %v449
    %v521 = vpack.c.b16 %v490, %v489
    %v522 = vpack.c.b16 %v492, %v491
    %v523 = vpack.c.b16 %v494, %v493
    %v524 = vpack.c.b16 %v496, %v495
    %v525 = vpack.c.b16 %v498, %v497
    %v526 = vpack.c.b16 %v500, %v499
    %v527 = vpack.c.b16 %v502, %v501
    %v528 = vpack.c.b16 %v504, %v503
    %v529 = vpack.c.b16 %v506, %v505
    %v530 = vpack.c.b16 %v508, %v507
    %v531 = vpack.c.b16 %v510, %v509
    %v532 = vpack.c.b16 %v512, %v511
    %v533 = vpack.c.b16 %v514, %v513
    %v534 = vpack.c.b16 %v516, %v515
    %v535 = vpack.c.b16 %v518, %v517
    %v536 = vpack.c.b16 %v520, %v519
    %553 = vmatprep.subr.bf16.mxu0 0
    %554 = vmatpush1.bf16.msra.mxu0 %v521
    %555 = vmatprep.subr.bf16.mxu0 0
    %556 = vmatpush1.bf16.msra.mxu0 %v522
    %557 = vmatprep.subr.bf16.mxu0 0
    %558 = vmatpush1.bf16.msra.mxu0 %v523
    %559 = vmatprep.subr.bf16.mxu0 0
    %560 = vmatpush1.bf16.msra.mxu0 %v524
    %561 = vmatprep.subr.bf16.mxu0 0
    %562 = vmatpush1.bf16.msra.mxu0 %v525
    %563 = vmatprep.subr.bf16.mxu0 0
    %564 = vmatpush1.bf16.msra.mxu0 %v526
    %565 = vmatprep.subr.bf16.mxu0 0
    %566 = vmatpush1.bf16.msra.mxu0 %v527
    %567 = vmatprep.subr.bf16.mxu0 0
    %568 = vmatpush1.bf16.msra.mxu0 %v528
    %569 = vmatprep.subr.bf16.mxu0 0
    %570 = vmatpush1.bf16.msra.mxu0 %v529
    %571 = vmatprep.subr.bf16.mxu0 0
    %572 = vmatpush1.bf16.msra.mxu0 %v530
    %573 = vmatprep.subr.bf16.mxu0 0
    %574 = vmatpush1.bf16.msra.mxu0 %v531
    %575 = vmatprep.subr.bf16.mxu0 0
    %576 = vmatpush1.bf16.msra.mxu0 %v532
    %577 = vmatprep.subr.bf16.mxu0 0
    %578 = vmatpush1.bf16.msra.mxu0 %v533
    %579 = vmatprep.subr.bf16.mxu0 0
    %580 = vmatpush1.bf16.msra.mxu0 %v534
    %581 = vmatprep.subr.bf16.mxu0 0
    %582 = vmatpush1.bf16.msra.mxu0 %v535
    %583 = vmatprep.subr.bf16.mxu0 0
    %584 = vmatpush1.bf16.msra.mxu0 %v536
    %585 = vmatprep.mubr.bf16.mxu0 %v417
    %586 = vmatmul.mubr.bf16.gmra.mrb[0].mxu0 %v416
    %v587 = vpop.f32.mrb[0].mxu0
    %v588 = vadd.f32 %v455, %v587
    %v589 = vpop.f32.mrb[0].mxu0
    %v590 = vpop.f32.mrb[0].mxu0
    %v591 = vpop.f32.mrb[0].mxu0
    %592 = vdwg.mxu0
    %593 = vst [vmem:[#allocation13] sm:$0xff] %v588
    // Predicated region
    $region66: #{tpu_custom_call.1} parent=1 // pred_check
      _
    $region67: #{tpu_custom_call.1} parent=1 // pred_check_branch
      %595 = sbr.rel (0) target = $region69
    $region68: #{tpu_custom_call.1} parent=1 // pred_region
      %s597 = ssub.s32 128, 128
      %598 = vsyncadd [#allocation4], %s597
      %s600 = sshll.u32 [#allocation13], 4
      %s601 = int_to_ptr.vmem [resolvable:$true] %s600
      %603 = dma.vmem_to_hbm [thread:$0]  %s601, 128, %s10, [#allocation4]
    $region69: #{tpu_custom_call.1} parent=1 // pred_fallthru
      _
    // Predicated region
    $region70: #{tpu_custom_call.1} parent=1 // pred_check
      _
    $region71: #{tpu_custom_call.1} parent=1 // pred_check_branch
      %605 = sbr.rel (0) target = $region73
    $region72: #{tpu_custom_call.1} parent=1 // pred_region
      %606 = dma.done [#allocation4], 128
    $region73: #{tpu_custom_call.1} parent=1 // pred_fallthru
      _
    %607 = vsyncpa [#allocation3], 1
    %608 = vsyncpa [#allocation6], 1
    %609 = vsyncpa [#allocation9], 1
    %610 = vsyncpa [#allocation12], 1
    %611 = vsyncpa [#allocation4], 1

</llo_original>
